<compile_context>
chip_gen: v5e
topology: v5e:2x2
jax: 0.10.0
libtpu: 0.0.40
codegen_flags: <defaults>
</compile_context>

<pallas_src>
import jax
import jax.numpy as jnp
from jax.experimental import pallas as pl
from jax.experimental.pallas import tpu as pltpu


def _dc_kernel(lat_tile_ref, ctrl_tile_ref, lat_full_ref, ctrl_full_ref,
               sq_lat_ref, sq_ctrl_ref, rsum_a_ref, rsum_b_ref, rsum_ab_ref):
    i = pl.program_id(0)
    tm = lat_tile_ref.shape[0]
    n = lat_full_ref.shape[0]

    # Diagonal mask of the (tm, n) slab, built once and shared by both slabs.
    # Rows past n (ragged last tile) never match a column, so no extra masking
    # is needed; their garbage row-sums land in output-block padding that
    # Pallas clips on writeback.
    row_ids = i * tm + jax.lax.broadcasted_iota(jnp.int32, (tm, 1), 0)  # (tm,1)
    col_ids = jax.lax.broadcasted_iota(jnp.int32, (tm, n), 1)           # (tm,n)
    diag = col_ids == row_ids

    def dist_slab(q_ref, k_ref, sq_k_ref):
        # ||q_i - k_j|| via the Gram identity.  sq_k (the per-column squared
        # norms) is hoisted to the wrapper; sq_q is O(tm*d), negligible.
        q = q_ref[...].astype(jnp.float32)
        k = k_ref[...].astype(jnp.float32)
        sq_q = jnp.sum(q * q, axis=-1, keepdims=True)                   # (tm,1)
        gram2 = jax.lax.dot_general(                                    # 2*q@k.T
            q + q, k, (((1,), (1,)), ((), ())),
            preferred_element_type=jnp.float32)
        d2 = (sq_q + sq_k_ref[...]) - gram2                             # (tm,n)
        # Clamp FP cancellation; pin the diagonal to exactly 0 so it matches
        # the reference's sqrt(0 + 1e-12).
        return jnp.sqrt(jnp.where(diag, 0.0, jnp.maximum(d2, 0.0)) + 1e-12)

    a = dist_slab(lat_tile_ref, lat_full_ref, sq_lat_ref)
    b = dist_slab(ctrl_tile_ref, ctrl_full_ref, sq_ctrl_ref)

    # Only three full-row reductions leave the kernel; double-centring and the
    # Frobenius sums are reconstructed from them (plus an O(N*D) analytic term)
    # in the wrapper -> no centred slab and no extra product slabs.
    rsum_a_ref[...] = jnp.sum(a, axis=-1, keepdims=True)
    rsum_b_ref[...] = jnp.sum(b, axis=-1, keepdims=True)
    rsum_ab_ref[...] = jnp.sum(a * b, axis=-1, keepdims=True)


def _pick_tile_and_vmem(n, d1, d2, row_tile):
    """Per-generation VMEM budget and row-tile size."""
    try:
        vmem_cap = int(pltpu.get_tpu_info().vmem_capacity_bytes)
    except Exception:
        vmem_cap = 64 * 1024 * 1024  # conservative fallback (v7x-sized)
    # 128 MiB parts (v5e/v6e) -> 112 MiB scoped; 64 MiB v7x -> 48 MiB scoped.
    vmem_limit = max(32 * 1024 * 1024,
                     min(vmem_cap - 16 * 1024 * 1024, 112 * 1024 * 1024))

    # ~6 live (tm, n) f32 slab temporaries; assume resident inputs may end up
    # double-buffered if the Buffered(1) request is unsupported.
    resident = 2 * 4 * (n * (d1 + d2) + 2 * n)
    budget = int(0.6 * vmem_limit) - resident
    tm_cap = max(8, budget // (6 * 4 * n))
    tm = max(8, min(row_tile, (tm_cap // 8) * 8))
    if tm >= n:
        if n > 256:
            # Keep >= 2 row tiles so the "parallel" grid axis can shard across
            # both TensorCores on v7x.
            tm = (-(-((n + 1) // 2) // 8)) * 8
        else:
            tm = n
    return tm, vmem_limit


def loss_dc(latent, control, *, row_tile=512):
    """Pallas implementation of Loss_DC.forward(latent, control) -> scalar."""
    latent = jnp.asarray(latent, jnp.float32)
    control = jnp.asarray(control, jnp.float32)
    n, d1 = latent.shape
    n_b, d2 = control.shape
    assert n == n_b, "latent/control must have the same number of samples"

    tm, vmem_limit = _pick_tile_and_vmem(n, d1, d2, row_tile)
    num_tiles = pl.cdiv(n, tm)

    # Hoisted once (O(N*D)): per-sample squared norms, used as the (1, N)
    # column term of the Gram identity inside every grid step.
    sq_lat = jnp.sum(latent * latent, axis=-1)     # (n,)
    sq_ctrl = jnp.sum(control * control, axis=-1)  # (n,)

    out_shape = (
        jax.ShapeDtypeStruct((n, 1), jnp.float32),  # row sums of dist(latent)
        jax.ShapeDtypeStruct((n, 1), jnp.float32),  # row sums of dist(control)
        jax.ShapeDtypeStruct((n, 1), jnp.float32),  # row sums of dist_a*dist_b
    )
    out_specs = [pl.BlockSpec((tm, 1), lambda i: (i, 0)) for _ in range(3)]

    def build(resident_buffers):
        def res_spec(shape):
            kwargs = {}
            if resident_buffers == 1:
                # Block index never changes -> no need to double-buffer; frees
                # VMEM headroom (matters most on v7x's 64 MiB per core).
                kwargs["pipeline_mode"] = pl.Buffered(1)
            return pl.BlockSpec(shape, lambda i: tuple(0 for _ in shape),
                                **kwargs)

        in_specs = [
            pl.BlockSpec((tm, d1), lambda i: (i, 0)),   # latent row tile
            pl.BlockSpec((tm, d2), lambda i: (i, 0)),   # control row tile
            res_spec((n, d1)),                          # full latent (resident)
            res_spec((n, d2)),                          # full control (resident)
            res_spec((1, n)),                           # ||latent_j||^2
            res_spec((1, n)),                           # ||control_j||^2
        ]
        return pl.pallas_call(
            _dc_kernel,
            out_shape=out_shape,
            grid_spec=pltpu.PrefetchScalarGridSpec(
                num_scalar_prefetch=0,
                grid=(num_tiles,),
                in_specs=in_specs,
                out_specs=out_specs,
            ),
            compiler_params=pltpu.CompilerParams(
                dimension_semantics=("parallel",),
                vmem_limit_bytes=int(vmem_limit),
            ),
        )

    args = (latent, control, latent, control, sq_lat[None, :], sq_ctrl[None, :])
    try:
        rsum_a, rsum_b, rsum_ab = build(1)(*args)
    except Exception:
        # TODO(synk): pl.Buffered(1) unsupported on this jax version; fall back
        # to default double-buffered resident inputs.
        rsum_a, rsum_b, rsum_ab = build(2)(*args)

    hi = jax.lax.Precision.HIGHEST
    rsum_a = rsum_a[:, 0]
    rsum_b = rsum_b[:, 0]
    rsum_ab = rsum_ab[:, 0]

    n_f = jnp.float32(n)
    inv_n = jnp.float32(1.0) / n_f

    # Exact row sums of the *squared* distance matrices, O(N*D), done once:
    #   sum_j d2_ij = n*|x_i|^2 + sum_j |x_j|^2 - 2 <x_i, sum_j x_j>
    #   sum_j a_ij^2 = sum_j d2_ij + n * 1e-12
    def rowsum_sq(x, sq):
        xsum = jnp.sum(x, axis=0)
        return (n_f * sq + jnp.sum(sq)
                - 2.0 * jnp.dot(x, xsum, precision=hi)
                + n_f * jnp.float32(1e-12))

    rsum_a2 = rowsum_sq(latent, sq_lat)
    rsum_b2 = rowsum_sq(control, sq_ctrl)

    # Row-centred Frobenius sums via the per-row identity
    #   sum_j (a_ij - r_i)(b_ij - s_i) = sum_j a_ij*b_ij - rs_a_i*rs_b_i / n.
    # (Flagged conditioning concern: this is ~1 digit worse than the explicit
    #  centred-slab form; validated against the pure-JAX reference below.)
    pab = jnp.sum(rsum_ab - rsum_a * rsum_b * inv_n)
    paa = jnp.sum(rsum_a2 - rsum_a * rsum_a * inv_n)
    pbb = jnp.sum(rsum_b2 - rsum_b * rsum_b * inv_n)

    # Rank-1 column correction (centre first; row means == column means by
    # symmetry), giving the fully double-centred sums.
    r = rsum_a * inv_n
    s = rsum_b * inv_n
    ct = r - jnp.mean(r)
    dt = s - jnp.mean(s)
    s_ab = pab - n_f * jnp.dot(ct, dt, precision=hi)
    s_aa = paa - n_f * jnp.dot(ct, ct, precision=hi)
    s_bb = pbb - n_f * jnp.dot(dt, dt, precision=hi)

    n2 = n_f * n_f
    gamma_xy = s_ab / n2
    gamma_xx = s_aa / n2
    gamma_yy = s_bb / n2
    return gamma_xy / jnp.sqrt(gamma_xx * gamma_yy + jnp.float32(1e-9))


def _reference_loss_dc(latent, control):
    """Pure-JAX reference mirroring the torch code exactly (broadcast diffs)."""
    def pdist(z):
        diff = z[None, :, :] - z[:, None, :]
        return jnp.sqrt(jnp.sum(jnp.square(diff), axis=-1) + 1e-12)

    ma = pdist(latent)
    mb = pdist(control)

    def center(m):
        return (m - jnp.mean(m, axis=0, keepdims=True)
                  - jnp.mean(m, axis=1, keepdims=True)
                  + jnp.mean(m))

    A = center(ma)
    B = center(mb)
    n2 = A.shape[0] * A.shape[1]
    gxy = jnp.sum(A * B) / n2
    gxx = jnp.sum(A * A) / n2
    gyy = jnp.sum(B * B) / n2
    return gxy / jnp.sqrt(gxx * gyy + 1e-9)


if __name__ == "__main__":
    key = jax.random.PRNGKey(0)
    k1, k2, k3, k4 = jax.random.split(key, 4)

    # Case 1: small single-tile case (typical batch-sized use of this loss).
    N, D_LATENT, D_CONTROL = 8, 32, 16
    latent = jax.random.normal(k1, (N, D_LATENT), dtype=jnp.float32)
    control = jax.random.normal(k2, (N, D_CONTROL), dtype=jnp.float32)
    dc = jax.block_until_ready(loss_dc(latent, control))
    ref = jax.block_until_ready(_reference_loss_dc(latent, control))
    assert dc.shape == (), f"expected scalar, got {dc.shape}"
    assert jnp.allclose(dc, ref, rtol=1e-3, atol=1e-5), (dc, ref)

    # Case 2: multi-tile path with a ragged final row tile (exercises the
    # streaming "parallel" grid + writeback clipping); still small.
    N2 = 300
    latent2 = jax.random.normal(k3, (N2, D_LATENT), dtype=jnp.float32)
    control2 = jax.random.normal(k4, (N2, D_CONTROL), dtype=jnp.float32)
    dc2 = jax.block_until_ready(loss_dc(latent2, control2))
    ref2 = jax.block_until_ready(_reference_loss_dc(latent2, control2))
    assert dc2.shape == ()
    assert jnp.allclose(dc2, ref2, rtol=1e-3, atol=1e-5), (dc2, ref2)

    print("KERNEL_OK")
</pallas_src>

<mosaic_0001>
module attributes {stable_mosaic.version = 11 : i64} {
  func.func @_dc_kernel(%arg0: i32, %arg1: memref<8x32xf32, #tpu.memory_space<vmem>>, %arg2: memref<8x16xf32, #tpu.memory_space<vmem>>, %arg3: memref<8x32xf32, #tpu.memory_space<vmem>>, %arg4: memref<8x16xf32, #tpu.memory_space<vmem>>, %arg5: memref<1x8xf32, #tpu.memory_space<vmem>>, %arg6: memref<1x8xf32, #tpu.memory_space<vmem>>, %arg7: memref<8x1xf32, #tpu.memory_space<vmem>>, %arg8: memref<8x1xf32, #tpu.memory_space<vmem>>, %arg9: memref<8x1xf32, #tpu.memory_space<vmem>>) attributes {dimension_semantics = [#tpu.dimension_semantics<parallel>], iteration_bounds = array<i64: 1>, scalar_prefetch = 0 : i64, scratch_operands = 0 : i64, tpu.core_type = #tpu.core_type<tc>, window_params = [{transform_indices = @transform_0, window_bounds = array<i64: 8, 32>}, {transform_indices = @transform_1, window_bounds = array<i64: 8, 16>}, {pipeline_mode = #tpu.pipeline_mode<synchronous>, transform_indices = @transform_2, window_bounds = array<i64: 8, 32>}, {pipeline_mode = #tpu.pipeline_mode<synchronous>, transform_indices = @transform_3, window_bounds = array<i64: 8, 16>}, {pipeline_mode = #tpu.pipeline_mode<synchronous>, transform_indices = @transform_4, window_bounds = array<i64: 1, 8>}, {pipeline_mode = #tpu.pipeline_mode<synchronous>, transform_indices = @transform_5, window_bounds = array<i64: 1, 8>}, {transform_indices = @transform_6, window_bounds = array<i64: 8, 1>}, {transform_indices = @transform_7, window_bounds = array<i64: 8, 1>}, {transform_indices = @transform_8, window_bounds = array<i64: 8, 1>}]} {
    %c8_i32 = arith.constant 8 : i32
    %0 = arith.muli %arg0, %c8_i32 : i32
    %1 = tpu.iota {dimensions = array<i32: 0>} : vector<8x1xi32>
    %2 = vector.broadcast %0 : i32 to vector<8x1xi32>
    %3 = arith.addi %2, %1 : vector<8x1xi32>
    %4 = tpu.iota {dimensions = array<i32: 1>} : vector<8x8xi32>
    %5 = vector.broadcast %3 : vector<8x1xi32> to vector<8x8xi32>
    %6 = arith.cmpi eq, %4, %5 : vector<8x8xi32>
    %c0 = arith.constant 0 : index
    %c0_0 = arith.constant 0 : index
    %7 = vector.load %arg1[%c0, %c0_0] : memref<8x32xf32, #tpu.memory_space<vmem>>, vector<8x32xf32>
    %c0_1 = arith.constant 0 : index
    %c0_2 = arith.constant 0 : index
    %8 = vector.load %arg3[%c0_1, %c0_2] : memref<8x32xf32, #tpu.memory_space<vmem>>, vector<8x32xf32>
    %9 = arith.mulf %7, %7 : vector<8x32xf32>
    %cst = arith.constant dense<0.000000e+00> : vector<8xf32>
    %10 = vector.multi_reduction <add>, %9, %cst [1] : vector<8x32xf32> to vector<8xf32>
    %11 = vector.shape_cast %10 : vector<8xf32> to vector<8x1xf32>
    %12 = arith.addf %7, %7 : vector<8x32xf32>
    %cst_3 = arith.constant dense<0.000000e+00> : vector<8x8xf32>
    %13 = tpu.matmul %12, %8, %cst_3 {dimension_numbers = #tpu.dot_dimension_numbers<[1], [1], [0], [0], [0, 0, 1, 0], [], []>} : vector<8x32xf32>, vector<8x32xf32>, vector<8x8xf32> -> vector<8x8xf32>
    %c0_4 = arith.constant 0 : index
    %c0_5 = arith.constant 0 : index
    %14 = vector.load %arg5[%c0_4, %c0_5] : memref<1x8xf32, #tpu.memory_space<vmem>>, vector<1x8xf32>
    %15 = vector.broadcast %11 : vector<8x1xf32> to vector<8x8xf32>
    %16 = vector.broadcast %14 : vector<1x8xf32> to vector<8x8xf32>
    %17 = arith.addf %15, %16 : vector<8x8xf32>
    %18 = arith.subf %17, %13 : vector<8x8xf32>
    %cst_6 = arith.constant 0.000000e+00 : f32
    %19 = vector.broadcast %cst_6 : f32 to vector<8x8xf32>
    %20 = arith.maximumf %18, %19 : vector<8x8xf32>
    %cst_7 = arith.constant 0.000000e+00 : f32
    %21 = vector.broadcast %cst_7 : f32 to vector<8x8xf32>
    %22 = arith.select %6, %21, %20 : vector<8x8xi1>, vector<8x8xf32>
    %cst_8 = arith.constant 9.99999996E-13 : f32
    %23 = vector.broadcast %cst_8 : f32 to vector<8x8xf32>
    %24 = arith.addf %22, %23 : vector<8x8xf32>
    %25 = math.sqrt %24 : vector<8x8xf32>
    %c0_9 = arith.constant 0 : index
    %c0_10 = arith.constant 0 : index
    %26 = vector.load %arg2[%c0_9, %c0_10] : memref<8x16xf32, #tpu.memory_space<vmem>>, vector<8x16xf32>
    %c0_11 = arith.constant 0 : index
    %c0_12 = arith.constant 0 : index
    %27 = vector.load %arg4[%c0_11, %c0_12] : memref<8x16xf32, #tpu.memory_space<vmem>>, vector<8x16xf32>
    %28 = arith.mulf %26, %26 : vector<8x16xf32>
    %cst_13 = arith.constant dense<0.000000e+00> : vector<8xf32>
    %29 = vector.multi_reduction <add>, %28, %cst_13 [1] : vector<8x16xf32> to vector<8xf32>
    %30 = vector.shape_cast %29 : vector<8xf32> to vector<8x1xf32>
    %31 = arith.addf %26, %26 : vector<8x16xf32>
    %cst_14 = arith.constant dense<0.000000e+00> : vector<8x8xf32>
    %32 = tpu.matmul %31, %27, %cst_14 {dimension_numbers = #tpu.dot_dimension_numbers<[1], [1], [0], [0], [0, 0, 1, 0], [], []>} : vector<8x16xf32>, vector<8x16xf32>, vector<8x8xf32> -> vector<8x8xf32>
    %c0_15 = arith.constant 0 : index
    %c0_16 = arith.constant 0 : index
    %33 = vector.load %arg6[%c0_15, %c0_16] : memref<1x8xf32, #tpu.memory_space<vmem>>, vector<1x8xf32>
    %34 = vector.broadcast %30 : vector<8x1xf32> to vector<8x8xf32>
    %35 = vector.broadcast %33 : vector<1x8xf32> to vector<8x8xf32>
    %36 = arith.addf %34, %35 : vector<8x8xf32>
    %37 = arith.subf %36, %32 : vector<8x8xf32>
    %cst_17 = arith.constant 0.000000e+00 : f32
    %38 = vector.broadcast %cst_17 : f32 to vector<8x8xf32>
    %39 = arith.maximumf %37, %38 : vector<8x8xf32>
    %cst_18 = arith.constant 0.000000e+00 : f32
    %40 = vector.broadcast %cst_18 : f32 to vector<8x8xf32>
    %41 = arith.select %6, %40, %39 : vector<8x8xi1>, vector<8x8xf32>
    %cst_19 = arith.constant 9.99999996E-13 : f32
    %42 = vector.broadcast %cst_19 : f32 to vector<8x8xf32>
    %43 = arith.addf %41, %42 : vector<8x8xf32>
    %44 = math.sqrt %43 : vector<8x8xf32>
    %cst_20 = arith.constant dense<0.000000e+00> : vector<8xf32>
    %45 = vector.multi_reduction <add>, %25, %cst_20 [1] : vector<8x8xf32> to vector<8xf32>
    %46 = vector.shape_cast %45 : vector<8xf32> to vector<8x1xf32>
    %c0_21 = arith.constant 0 : index
    %c0_22 = arith.constant 0 : index
    %47 = vector.load %arg7[%c0_21, %c0_22] : memref<8x1xf32, #tpu.memory_space<vmem>>, vector<8x1xf32>
    tpu.vector_store %arg7[%c0_21, %c0_22], %46 {strides = array<i32>} : memref<8x1xf32, #tpu.memory_space<vmem>>, vector<8x1xf32>,
    %cst_23 = arith.constant dense<0.000000e+00> : vector<8xf32>
    %48 = vector.multi_reduction <add>, %44, %cst_23 [1] : vector<8x8xf32> to vector<8xf32>
    %49 = vector.shape_cast %48 : vector<8xf32> to vector<8x1xf32>
    %c0_24 = arith.constant 0 : index
    %c0_25 = arith.constant 0 : index
    %50 = vector.load %arg8[%c0_24, %c0_25] : memref<8x1xf32, #tpu.memory_space<vmem>>, vector<8x1xf32>
    tpu.vector_store %arg8[%c0_24, %c0_25], %49 {strides = array<i32>} : memref<8x1xf32, #tpu.memory_space<vmem>>, vector<8x1xf32>,
    %51 = arith.mulf %25, %44 : vector<8x8xf32>
    %cst_26 = arith.constant dense<0.000000e+00> : vector<8xf32>
    %52 = vector.multi_reduction <add>, %51, %cst_26 [1] : vector<8x8xf32> to vector<8xf32>
    %53 = vector.shape_cast %52 : vector<8xf32> to vector<8x1xf32>
    %c0_27 = arith.constant 0 : index
    %c0_28 = arith.constant 0 : index
    %54 = vector.load %arg9[%c0_27, %c0_28] : memref<8x1xf32, #tpu.memory_space<vmem>>, vector<8x1xf32>
    tpu.vector_store %arg9[%c0_27, %c0_28], %53 {strides = array<i32>} : memref<8x1xf32, #tpu.memory_space<vmem>>, vector<8x1xf32>,
    return
  }
  func.func @transform_0(%arg0: i32) -> (i32, i32) {
    %c0_i32 = arith.constant 0 : i32
    %c0_i32_0 = arith.constant 0 : i32
    return %arg0, %c0_i32 : i32, i32
  }
  func.func @transform_1(%arg0: i32) -> (i32, i32) {
    %c0_i32 = arith.constant 0 : i32
    %c0_i32_0 = arith.constant 0 : i32
    return %arg0, %c0_i32 : i32, i32
  }
  func.func @transform_2(%arg0: i32) -> (i32, i32) {
    %c0_i32 = arith.constant 0 : i32
    %c0_i32_0 = arith.constant 0 : i32
    %c0_i32_1 = arith.constant 0 : i32
    return %c0_i32, %c0_i32_0 : i32, i32
  }
  func.func @transform_3(%arg0: i32) -> (i32, i32) {
    %c0_i32 = arith.constant 0 : i32
    %c0_i32_0 = arith.constant 0 : i32
    %c0_i32_1 = arith.constant 0 : i32
    return %c0_i32, %c0_i32_0 : i32, i32
  }
  func.func @transform_4(%arg0: i32) -> (i32, i32) {
    %c0_i32 = arith.constant 0 : i32
    %c0_i32_0 = arith.constant 0 : i32
    %c0_i32_1 = arith.constant 0 : i32
    return %c0_i32, %c0_i32_0 : i32, i32
  }
  func.func @transform_5(%arg0: i32) -> (i32, i32) {
    %c0_i32 = arith.constant 0 : i32
    %c0_i32_0 = arith.constant 0 : i32
    %c0_i32_1 = arith.constant 0 : i32
    return %c0_i32, %c0_i32_0 : i32, i32
  }
  func.func @transform_6(%arg0: i32) -> (i32, i32) {
    %c0_i32 = arith.constant 0 : i32
    %c0_i32_0 = arith.constant 0 : i32
    return %arg0, %c0_i32 : i32, i32
  }
  func.func @transform_7(%arg0: i32) -> (i32, i32) {
    %c0_i32 = arith.constant 0 : i32
    %c0_i32_0 = arith.constant 0 : i32
    return %arg0, %c0_i32 : i32, i32
  }
  func.func @transform_8(%arg0: i32) -> (i32, i32) {
    %c0_i32 = arith.constant 0 : i32
    %c0_i32_0 = arith.constant 0 : i32
    return %arg0, %c0_i32 : i32, i32
  }
}

module attributes {stable_mosaic.version = 11 : i64} {
  func.func @_dc_kernel(%arg0: i32, %arg1: memref<8x32xf32, #tpu.memory_space<vmem>>, %arg2: memref<8x16xf32, #tpu.memory_space<vmem>>, %arg3: memref<8x32xf32, #tpu.memory_space<vmem>>, %arg4: memref<8x16xf32, #tpu.memory_space<vmem>>, %arg5: memref<1x8xf32, #tpu.memory_space<vmem>>, %arg6: memref<1x8xf32, #tpu.memory_space<vmem>>, %arg7: memref<8x1xf32, #tpu.memory_space<vmem>>, %arg8: memref<8x1xf32, #tpu.memory_space<vmem>>, %arg9: memref<8x1xf32, #tpu.memory_space<vmem>>) attributes {dimension_semantics = [#tpu.dimension_semantics<parallel>], iteration_bounds = array<i64: 1>, scalar_prefetch = 0 : i64, scratch_operands = 0 : i64, tpu.core_type = #tpu.core_type<tc>, window_params = [{transform_indices = @transform_0, window_bounds = array<i64: 8, 32>}, {transform_indices = @transform_1, window_bounds = array<i64: 8, 16>}, {pipeline_mode = #tpu.pipeline_mode<synchronous>, transform_indices = @transform_2, window_bounds = array<i64: 8, 32>}, {pipeline_mode = #tpu.pipeline_mode<synchronous>, transform_indices = @transform_3, window_bounds = array<i64: 8, 16>}, {pipeline_mode = #tpu.pipeline_mode<synchronous>, transform_indices = @transform_4, window_bounds = array<i64: 1, 8>}, {pipeline_mode = #tpu.pipeline_mode<synchronous>, transform_indices = @transform_5, window_bounds = array<i64: 1, 8>}, {transform_indices = @transform_6, window_bounds = array<i64: 8, 1>}, {transform_indices = @transform_7, window_bounds = array<i64: 8, 1>}, {transform_indices = @transform_8, window_bounds = array<i64: 8, 1>}]} {
    %c8_i32 = arith.constant 8 : i32
    %0 = arith.muli %arg0, %c8_i32 : i32
    %1 = tpu.iota {dimensions = array<i32: 0>} : vector<8x1xi32>
    %2 = vector.broadcast %0 : i32 to vector<8x1xi32>
    %3 = arith.addi %2, %1 : vector<8x1xi32>
    %4 = tpu.iota {dimensions = array<i32: 1>} : vector<8x8xi32>
    %5 = vector.broadcast %3 : vector<8x1xi32> to vector<8x8xi32>
    %6 = arith.cmpi eq, %4, %5 : vector<8x8xi32>
    %c0 = arith.constant 0 : index
    %c0_0 = arith.constant 0 : index
    %7 = vector.load %arg1[%c0, %c0_0] : memref<8x32xf32, #tpu.memory_space<vmem>>, vector<8x32xf32>
    %c0_1 = arith.constant 0 : index
    %c0_2 = arith.constant 0 : index
    %8 = vector.load %arg3[%c0_1, %c0_2] : memref<8x32xf32, #tpu.memory_space<vmem>>, vector<8x32xf32>
    %9 = arith.mulf %7, %7 : vector<8x32xf32>
    %cst = arith.constant dense<0.000000e+00> : vector<8xf32>
    %10 = vector.multi_reduction <add>, %9, %cst [1] : vector<8x32xf32> to vector<8xf32>
    %11 = vector.shape_cast %10 : vector<8xf32> to vector<8x1xf32>
    %12 = arith.addf %7, %7 : vector<8x32xf32>
    %cst_3 = arith.constant dense<0.000000e+00> : vector<8x8xf32>
    %13 = tpu.matmul %12, %8, %cst_3 {dimension_numbers = #tpu.dot_dimension_numbers<[1], [1], [0], [0], [0, 0, 1, 0], [], []>} : vector<8x32xf32>, vector<8x32xf32>, vector<8x8xf32> -> vector<8x8xf32>
    %c0_4 = arith.constant 0 : index
    %c0_5 = arith.constant 0 : index
    %14 = vector.load %arg5[%c0_4, %c0_5] : memref<1x8xf32, #tpu.memory_space<vmem>>, vector<1x8xf32>
    %15 = vector.broadcast %11 : vector<8x1xf32> to vector<8x8xf32>
    %16 = vector.broadcast %14 : vector<1x8xf32> to vector<8x8xf32>
    %17 = arith.addf %15, %16 : vector<8x8xf32>
    %18 = arith.subf %17, %13 : vector<8x8xf32>
    %cst_6 = arith.constant 0.000000e+00 : f32
    %19 = vector.broadcast %cst_6 : f32 to vector<8x8xf32>
    %20 = arith.maximumf %18, %19 : vector<8x8xf32>
    %cst_7 = arith.constant 0.000000e+00 : f32
    %21 = vector.broadcast %cst_7 : f32 to vector<8x8xf32>
    %22 = arith.select %6, %21, %20 : vector<8x8xi1>, vector<8x8xf32>
    %cst_8 = arith.constant 9.99999996E-13 : f32
    %23 = vector.broadcast %cst_8 : f32 to vector<8x8xf32>
    %24 = arith.addf %22, %23 : vector<8x8xf32>
    %25 = math.sqrt %24 : vector<8x8xf32>
    %c0_9 = arith.constant 0 : index
    %c0_10 = arith.constant 0 : index
    %26 = vector.load %arg2[%c0_9, %c0_10] : memref<8x16xf32, #tpu.memory_space<vmem>>, vector<8x16xf32>
    %c0_11 = arith.constant 0 : index
    %c0_12 = arith.constant 0 : index
    %27 = vector.load %arg4[%c0_11, %c0_12] : memref<8x16xf32, #tpu.memory_space<vmem>>, vector<8x16xf32>
    %28 = arith.mulf %26, %26 : vector<8x16xf32>
    %cst_13 = arith.constant dense<0.000000e+00> : vector<8xf32>
    %29 = vector.multi_reduction <add>, %28, %cst_13 [1] : vector<8x16xf32> to vector<8xf32>
    %30 = vector.shape_cast %29 : vector<8xf32> to vector<8x1xf32>
    %31 = arith.addf %26, %26 : vector<8x16xf32>
    %cst_14 = arith.constant dense<0.000000e+00> : vector<8x8xf32>
    %32 = tpu.matmul %31, %27, %cst_14 {dimension_numbers = #tpu.dot_dimension_numbers<[1], [1], [0], [0], [0, 0, 1, 0], [], []>} : vector<8x16xf32>, vector<8x16xf32>, vector<8x8xf32> -> vector<8x8xf32>
    %c0_15 = arith.constant 0 : index
    %c0_16 = arith.constant 0 : index
    %33 = vector.load %arg6[%c0_15, %c0_16] : memref<1x8xf32, #tpu.memory_space<vmem>>, vector<1x8xf32>
    %34 = vector.broadcast %30 : vector<8x1xf32> to vector<8x8xf32>
    %35 = vector.broadcast %33 : vector<1x8xf32> to vector<8x8xf32>
    %36 = arith.addf %34, %35 : vector<8x8xf32>
    %37 = arith.subf %36, %32 : vector<8x8xf32>
    %cst_17 = arith.constant 0.000000e+00 : f32
    %38 = vector.broadcast %cst_17 : f32 to vector<8x8xf32>
    %39 = arith.maximumf %37, %38 : vector<8x8xf32>
    %cst_18 = arith.constant 0.000000e+00 : f32
    %40 = vector.broadcast %cst_18 : f32 to vector<8x8xf32>
    %41 = arith.select %6, %40, %39 : vector<8x8xi1>, vector<8x8xf32>
    %cst_19 = arith.constant 9.99999996E-13 : f32
    %42 = vector.broadcast %cst_19 : f32 to vector<8x8xf32>
    %43 = arith.addf %41, %42 : vector<8x8xf32>
    %44 = math.sqrt %43 : vector<8x8xf32>
    %cst_20 = arith.constant dense<0.000000e+00> : vector<8xf32>
    %45 = vector.multi_reduction <add>, %25, %cst_20 [1] : vector<8x8xf32> to vector<8xf32>
    %46 = vector.shape_cast %45 : vector<8xf32> to vector<8x1xf32>
    %c0_21 = arith.constant 0 : index
    %c0_22 = arith.constant 0 : index
    %47 = vector.load %arg7[%c0_21, %c0_22] : memref<8x1xf32, #tpu.memory_space<vmem>>, vector<8x1xf32>
    tpu.vector_store %arg7[%c0_21, %c0_22], %46 {strides = array<i32>} : memref<8x1xf32, #tpu.memory_space<vmem>>, vector<8x1xf32>,
    %cst_23 = arith.constant dense<0.000000e+00> : vector<8xf32>
    %48 = vector.multi_reduction <add>, %44, %cst_23 [1] : vector<8x8xf32> to vector<8xf32>
    %49 = vector.shape_cast %48 : vector<8xf32> to vector<8x1xf32>
    %c0_24 = arith.constant 0 : index
    %c0_25 = arith.constant 0 : index
    %50 = vector.load %arg8[%c0_24, %c0_25] : memref<8x1xf32, #tpu.memory_space<vmem>>, vector<8x1xf32>
    tpu.vector_store %arg8[%c0_24, %c0_25], %49 {strides = array<i32>} : memref<8x1xf32, #tpu.memory_space<vmem>>, vector<8x1xf32>,
    %51 = arith.mulf %25, %44 : vector<8x8xf32>
    %cst_26 = arith.constant dense<0.000000e+00> : vector<8xf32>
    %52 = vector.multi_reduction <add>, %51, %cst_26 [1] : vector<8x8xf32> to vector<8xf32>
    %53 = vector.shape_cast %52 : vector<8xf32> to vector<8x1xf32>
    %c0_27 = arith.constant 0 : index
    %c0_28 = arith.constant 0 : index
    %54 = vector.load %arg9[%c0_27, %c0_28] : memref<8x1xf32, #tpu.memory_space<vmem>>, vector<8x1xf32>
    tpu.vector_store %arg9[%c0_27, %c0_28], %53 {strides = array<i32>} : memref<8x1xf32, #tpu.memory_space<vmem>>, vector<8x1xf32>,
    return
  }
  func.func @transform_0(%arg0: i32) -> (i32, i32) {
    %c0_i32 = arith.constant 0 : i32
    %c0_i32_0 = arith.constant 0 : i32
    return %arg0, %c0_i32 : i32, i32
  }
  func.func @transform_1(%arg0: i32) -> (i32, i32) {
    %c0_i32 = arith.constant 0 : i32
    %c0_i32_0 = arith.constant 0 : i32
    return %arg0, %c0_i32 : i32, i32
  }
  func.func @transform_2(%arg0: i32) -> (i32, i32) {
    %c0_i32 = arith.constant 0 : i32
    %c0_i32_0 = arith.constant 0 : i32
    %c0_i32_1 = arith.constant 0 : i32
    return %c0_i32, %c0_i32_0 : i32, i32
  }
  func.func @transform_3(%arg0: i32) -> (i32, i32) {
    %c0_i32 = arith.constant 0 : i32
    %c0_i32_0 = arith.constant 0 : i32
    %c0_i32_1 = arith.constant 0 : i32
    return %c0_i32, %c0_i32_0 : i32, i32
  }
  func.func @transform_4(%arg0: i32) -> (i32, i32) {
    %c0_i32 = arith.constant 0 : i32
    %c0_i32_0 = arith.constant 0 : i32
    %c0_i32_1 = arith.constant 0 : i32
    return %c0_i32, %c0_i32_0 : i32, i32
  }
  func.func @transform_5(%arg0: i32) -> (i32, i32) {
    %c0_i32 = arith.constant 0 : i32
    %c0_i32_0 = arith.constant 0 : i32
    %c0_i32_1 = arith.constant 0 : i32
    return %c0_i32, %c0_i32_0 : i32, i32
  }
  func.func @transform_6(%arg0: i32) -> (i32, i32) {
    %c0_i32 = arith.constant 0 : i32
    %c0_i32_0 = arith.constant 0 : i32
    return %arg0, %c0_i32 : i32, i32
  }
  func.func @transform_7(%arg0: i32) -> (i32, i32) {
    %c0_i32 = arith.constant 0 : i32
    %c0_i32_0 = arith.constant 0 : i32
    return %arg0, %c0_i32 : i32, i32
  }
  func.func @transform_8(%arg0: i32) -> (i32, i32) {
    %c0_i32 = arith.constant 0 : i32
    %c0_i32_0 = arith.constant 0 : i32
    return %arg0, %c0_i32 : i32, i32
  }
}

</mosaic_0001>

<llo_original>
// kernel: tpu_custom_call.1
$region0: #{tpu_custom_call.1}
  #allocation0 [shape = 'u32[]', space=smem, size = 0x4, offset = 0x4, fixed_abs, tag = 'smem constant byte address 0x4 - core index']
  #allocation1 [shape = 'u32[72,128]{1,0:T(1,128)}', space=vmem, size = 0x9000, scoped, tag = 'internal scratch']
  %s0 = inlined_call_operand.hbm [shape: f32[8,32], index: 0, kind: input, shape index: {}]
  %s1 = inlined_call_operand.hbm [shape: f32[8,16], index: 1, kind: input, shape index: {}]
  %s2 = inlined_call_operand.hbm [shape: f32[8,32], index: 2, kind: input, shape index: {}]
  %s3 = inlined_call_operand.hbm [shape: f32[8,16], index: 3, kind: input, shape index: {}]
  %s4 = inlined_call_operand.vmem [shape: f32[1,8], index: 4, kind: input, shape index: {}]
  %s5 = inlined_call_operand.vmem [shape: f32[1,8], index: 5, kind: input, shape index: {}]
  %s6 = inlined_call_operand.vmem [shape: f32[8,1], index: 6, kind: output, shape index: {0}]
  %s7 = inlined_call_operand.vmem [shape: f32[8,1], index: 7, kind: output, shape index: {1}]
  %s8 = inlined_call_operand.vmem [shape: f32[8,1], index: 8, kind: output, shape index: {2}]
  %9 = xla_tuple %s6, %s7, %s8
  %s10 = sld [smem:[#allocation0]]
  $region66: #{tpu_custom_call.1} parent=0
    _
  %s12 = ssub.s32 1, %s10
  %s13 = scalar_select 0, %s12, %s10
  $region1: #{tpu_custom_call.1} parent=0
    #allocation2 [shape = 'u8[4096]{0}', space=vmem, size = 0x1000, scoped, tag = 'input window, operand 0, single buffered']
    #allocation3 [shape = 's32[1]{0}', space=sflag, size = 0x4, scoped, tag = 'scoped memory for tpu_custom_call.1']
    #allocation4 [shape = 'u8[4096]{0}', space=vmem, size = 0x1000, scoped, tag = 'input window, operand 1, single buffered']
    #allocation5 [shape = 's32[1]{0}', space=sflag, size = 0x4, scoped, tag = 'scoped memory for tpu_custom_call.1']
    #allocation6 [shape = 'u8[4096]{0}', space=vmem, size = 0x1000, scoped, tag = 'input window, operand 2, single buffered']
    #allocation7 [shape = 'u8[4096]{0}', space=vmem, size = 0x1000, scoped, tag = 'input window, operand 3, single buffered']
    #allocation8 [shape = 's32[1]{0}', space=sflag, size = 0x4, scoped, tag = 'scoped memory for tpu_custom_call.1']
    %14 = vsyncpa [#allocation3], 0
    %15 = vsyncpa [#allocation5], 0
    %16 = vsyncpa [#allocation8], 0
    // Predicated region
    $region2: #{tpu_custom_call.1} parent=1 // pred_check
      _
    $region3: #{tpu_custom_call.1} parent=1 // pred_check_branch
      %18 = sbr.rel (0) target = $region5
    $region4: #{tpu_custom_call.1} parent=1 // pred_region
      %20 = vsyncadd [#allocation3], 0
      %s22 = sshll.u32 %s0, 4
      %s23 = int_to_ptr.hbm [resolvable:$true] %s22
      %s24 = sshll.u32 [#allocation2], 4
      %s25 = int_to_ptr.vmem [resolvable:$true] %s24
      %27 = dma.hbm_to_vmem [thread:$0]  %s23, 128, %s25, [#allocation3]
    $region5: #{tpu_custom_call.1} parent=1 // pred_fallthru
      _
    // Predicated region
    $region6: #{tpu_custom_call.1} parent=1 // pred_check
      _
    $region7: #{tpu_custom_call.1} parent=1 // pred_check_branch
      %29 = sbr.rel (0) target = $region9
    $region8: #{tpu_custom_call.1} parent=1 // pred_region
      %31 = vsyncadd [#allocation5], 0
      %s33 = sshll.u32 %s1, 4
      %s34 = int_to_ptr.hbm [resolvable:$true] %s33
      %s35 = sshll.u32 [#allocation4], 4
      %s36 = int_to_ptr.vmem [resolvable:$true] %s35
      %38 = dma.hbm_to_vmem [thread:$0]  %s34, 128, %s36, [#allocation5]
    $region9: #{tpu_custom_call.1} parent=1 // pred_fallthru
      _
    // Predicated region
    $region10: #{tpu_custom_call.1} parent=1 // pred_check
      _
    $region11: #{tpu_custom_call.1} parent=1 // pred_check_branch
      %40 = sbr.rel (0) target = $region13
    $region12: #{tpu_custom_call.1} parent=1 // pred_region
      %42 = vsyncadd [#allocation5], 0
      %s44 = sshll.u32 %s2, 4
      %s45 = int_to_ptr.hbm [resolvable:$true] %s44
      %s46 = sshll.u32 [#allocation6], 4
      %s47 = int_to_ptr.vmem [resolvable:$true] %s46
      %49 = dma.hbm_to_vmem [thread:$0]  %s45, 128, %s47, [#allocation5]
    $region13: #{tpu_custom_call.1} parent=1 // pred_fallthru
      _
    // Predicated region
    $region14: #{tpu_custom_call.1} parent=1 // pred_check
      _
    $region15: #{tpu_custom_call.1} parent=1 // pred_check_branch
      %51 = sbr.rel (0) target = $region17
    $region16: #{tpu_custom_call.1} parent=1 // pred_region
      %53 = vsyncadd [#allocation8], 0
      %s55 = sshll.u32 %s3, 4
      %s56 = int_to_ptr.hbm [resolvable:$true] %s55
      %s57 = sshll.u32 [#allocation7], 4
      %s58 = int_to_ptr.vmem [resolvable:$true] %s57
      %60 = dma.hbm_to_vmem [thread:$0]  %s56, 128, %s58, [#allocation8]
    $region17: #{tpu_custom_call.1} parent=1 // pred_fallthru
      _
    // Predicated region
    $region18: #{tpu_custom_call.1} parent=1 // pred_check
      _
    $region19: #{tpu_custom_call.1} parent=1 // pred_check_branch
      %62 = sbr.rel (0) target = $region21
    $region20: #{tpu_custom_call.1} parent=1 // pred_region
      _
    $region21: #{tpu_custom_call.1} parent=1 // pred_fallthru
      _
    // Predicated region
    $region22: #{tpu_custom_call.1} parent=1 // pred_check
      _
    $region23: #{tpu_custom_call.1} parent=1 // pred_check_branch
      %64 = sbr.rel (0) target = $region25
    $region24: #{tpu_custom_call.1} parent=1 // pred_region
      _
    $region25: #{tpu_custom_call.1} parent=1 // pred_fallthru
      _
    // Predicated region
    $region26: #{tpu_custom_call.1} parent=1 // pred_check
      _
    $region27: #{tpu_custom_call.1} parent=1 // pred_check_branch
      %66 = sbr.rel (0) target = $region29
    $region28: #{tpu_custom_call.1} parent=1 // pred_region
      %68 = dma.done [#allocation3], 128
    $region29: #{tpu_custom_call.1} parent=1 // pred_fallthru
      _
    // Predicated region
    $region30: #{tpu_custom_call.1} parent=1 // pred_check
      _
    $region31: #{tpu_custom_call.1} parent=1 // pred_check_branch
      %70 = sbr.rel (0) target = $region33
    $region32: #{tpu_custom_call.1} parent=1 // pred_region
      %72 = dma.done [#allocation5], 128
    $region33: #{tpu_custom_call.1} parent=1 // pred_fallthru
      _
    // Predicated region
    $region34: #{tpu_custom_call.1} parent=1 // pred_check
      _
    $region35: #{tpu_custom_call.1} parent=1 // pred_check_branch
      %74 = sbr.rel (0) target = $region37
    $region36: #{tpu_custom_call.1} parent=1 // pred_region
      %76 = dma.done [#allocation5], 128
    $region37: #{tpu_custom_call.1} parent=1 // pred_fallthru
      _
    // Predicated region
    $region38: #{tpu_custom_call.1} parent=1 // pred_check
      _
    $region39: #{tpu_custom_call.1} parent=1 // pred_check_branch
      %78 = sbr.rel (0) target = $region41
    $region40: #{tpu_custom_call.1} parent=1 // pred_region
      %80 = dma.done [#allocation8], 128
    $region41: #{tpu_custom_call.1} parent=1 // pred_fallthru
      _
    %s81 = smul.u32 0, 8
    %v82 = vlaneseq
    %v83 = vshrl.u32 %v82, 7
    %v84 = vstv %s81
    %v85 = vadd.s32 %v84, %v83
    %v86 = vlaneseq
    %v87 = vand.u32 %v86, 127
    %vm88 = vcmp.eq.s32.totalorder %v87, %v85
    %v89 = vld [vmem:[#allocation2] sm:$0xff]
    %v90 = vld [vmem:[#allocation6] sm:$0xff]
    %v91 = vmul.f32 %v89, %v89
    %vm92 = vcmask 261120
    %v93 = vsel %vm92, %v91, 0.0
    %94 = vadd.xlane.f32.xlu0 %v93
    %v95 = vpop.xlane.xlu0 %94
    %v96 = vadd.f32 %v89, %v89
    %v98 = vsel %vm92, %v96, 0
    %v101 = vsel %vm92, %v90, 0
    %103 = vmatpush.xpose.msra.mxu0 0.0
    %104 = vmatpush.xpose.msra.mxu0 0.0
    %105 = vmatpush.xpose.msra.mxu0 0.0
    %106 = vmatpush.xpose.msra.mxu0 0.0
    %107 = vmatpush.xpose.msra.mxu0 0.0
    %108 = vmatpush.xpose.msra.mxu0 0.0
    %109 = vmatpush.xpose.msra.mxu0 0.0
    %110 = vmatpush.xpose.msra.mxu0 0.0
    %111 = vmatpush.xpose.msra.mxu0 0.0
    %112 = vmatpush.xpose.msra.mxu0 0.0
    %113 = vmatpush.xpose.msra.mxu0 0.0
    %114 = vmatpush.xpose.msra.mxu0 0.0
    %115 = vmatpush.xpose.msra.mxu0 0.0
    %116 = vmatpush.xpose.msra.mxu0 0.0
    %117 = vmatpush.xpose.msra.mxu0 0.0
    %118 = vmatpush.xpose.msra.mxu0 %v101
    %119 = vmatmul.f32.gmra.mxu0 %v98
    %v120 = vpop.f32.mrf.mxu0
    %v121 = vadd.f32 0.0, %v120
    %122 = vdwg.mxu0
    %v123 = vld [vmem:[%s4] sm:$0x1]
    %v125 = vperm.slane %v123, 0
    %v127 = vadd.f32 %v95, %v125
    %v128 = vsub.f32 %v127, %v121
    %v129 = vmax.f32 %v128, 0.0
    %v130 = vsel %vm88, 0.0, %v129
    %v131 = vadd.f32 %v130, 1e-12
    %v132 = vrsqrt.pop %v131
    %v133 = vmul.f32 %v132, %v131
    %v134 = vmul.f32 %v133, %v132
    %v135 = vmul.f32 0.5, %v134
    %v136 = vsub.f32 1.5, %v135
    %v137 = vmul.f32 %v132, %v136
    %v138 = vmul.f32 %v131, %v137
    %vm139 = vcmp.eq.f32.partialorder %v131, inf
    %v140 = vsel %vm139, %v131, %v138
    %vm141 = vcmp.eq.f32.partialorder %v131, 0.0
    %v142 = vand.u32 %v131, 2147483648
    %v143 = vsel %vm141, %v142, %v140
    %v144 = vld [vmem:[#allocation4] sm:$0xff]
    %v145 = vld [vmem:[#allocation7] sm:$0xff]
    %v146 = vmul.f32 %v144, %v144
    %vm147 = vcmask 130048
    %v148 = vsel %vm147, %v146, 0.0
    %149 = vadd.xlane.f32.xlu0 %v148
    %v150 = vpop.xlane.xlu0 %149
    %v151 = vadd.f32 %v144, %v144
    %v153 = vsel %vm147, %v151, 0
    %v156 = vsel %vm147, %v145, 0
    %158 = vmatpush.xpose.msra.mxu0 0.0
    %159 = vmatpush.xpose.msra.mxu0 0.0
    %160 = vmatpush.xpose.msra.mxu0 0.0
    %161 = vmatpush.xpose.msra.mxu0 0.0
    %162 = vmatpush.xpose.msra.mxu0 0.0
    %163 = vmatpush.xpose.msra.mxu0 0.0
    %164 = vmatpush.xpose.msra.mxu0 0.0
    %165 = vmatpush.xpose.msra.mxu0 0.0
    %166 = vmatpush.xpose.msra.mxu0 0.0
    %167 = vmatpush.xpose.msra.mxu0 0.0
    %168 = vmatpush.xpose.msra.mxu0 0.0
    %169 = vmatpush.xpose.msra.mxu0 0.0
    %170 = vmatpush.xpose.msra.mxu0 0.0
    %171 = vmatpush.xpose.msra.mxu0 0.0
    %172 = vmatpush.xpose.msra.mxu0 0.0
    %173 = vmatpush.xpose.msra.mxu0 %v156
    %174 = vmatmul.f32.gmra.mxu0 %v153
    %v175 = vpop.f32.mrf.mxu0
    %v176 = vadd.f32 0.0, %v175
    %177 = vdwg.mxu0
    %v178 = vld [vmem:[%s5] sm:$0x1]
    %v180 = vperm.slane %v178, 0
    %v182 = vadd.f32 %v150, %v180
    %v183 = vsub.f32 %v182, %v176
    %v184 = vmax.f32 %v183, 0.0
    %v185 = vsel %vm88, 0.0, %v184
    %v186 = vadd.f32 %v185, 1e-12
    %v187 = vrsqrt.pop %v186
    %v188 = vmul.f32 %v187, %v186
    %v189 = vmul.f32 %v188, %v187
    %v190 = vmul.f32 0.5, %v189
    %v191 = vsub.f32 1.5, %v190
    %v192 = vmul.f32 %v187, %v191
    %v193 = vmul.f32 %v186, %v192
    %vm194 = vcmp.eq.f32.partialorder %v186, inf
    %v195 = vsel %vm194, %v186, %v193
    %vm196 = vcmp.eq.f32.partialorder %v186, 0.0
    %v197 = vand.u32 %v186, 2147483648
    %v198 = vsel %vm196, %v197, %v195
    %vm199 = vcmask 64512
    %v200 = vsel %vm199, %v143, 0.0
    %201 = vadd.xlane.f32.xlu0 %v200
    %v202 = vpop.xlane.xlu0 %201
    %vm203 = vcmask 7168
    %204 = vst.msk [vmem:[%s6] sm:$0xff] %vm203, %v202
    %v205 = vsel %vm199, %v198, 0.0
    %206 = vadd.xlane.f32.xlu0 %v205
    %v207 = vpop.xlane.xlu0 %206
    %208 = vst.msk [vmem:[%s7] sm:$0xff] %vm203, %v207
    %v209 = vmul.f32 %v143, %v198
    %v210 = vsel %vm199, %v209, 0.0
    %211 = vadd.xlane.f32.xlu0 %v210
    %v212 = vpop.xlane.xlu0 %211
    %213 = vst.msk [vmem:[%s8] sm:$0xff] %vm203, %v212
    // Predicated region
    $region42: #{tpu_custom_call.1} parent=1 // pred_check
      _
    $region43: #{tpu_custom_call.1} parent=1 // pred_check_branch
      %215 = sbr.rel (0) target = $region45
    $region44: #{tpu_custom_call.1} parent=1 // pred_region
      _
    $region45: #{tpu_custom_call.1} parent=1 // pred_fallthru
      _
    // Predicated region
    $region46: #{tpu_custom_call.1} parent=1 // pred_check
      _
    $region47: #{tpu_custom_call.1} parent=1 // pred_check_branch
      %217 = sbr.rel (0) target = $region49
    $region48: #{tpu_custom_call.1} parent=1 // pred_region
      _
    $region49: #{tpu_custom_call.1} parent=1 // pred_fallthru
      _
    // Predicated region
    $region50: #{tpu_custom_call.1} parent=1 // pred_check
      _
    $region51: #{tpu_custom_call.1} parent=1 // pred_check_branch
      %219 = sbr.rel (0) target = $region53
    $region52: #{tpu_custom_call.1} parent=1 // pred_region
      _
    $region53: #{tpu_custom_call.1} parent=1 // pred_fallthru
      _
    // Predicated region
    $region54: #{tpu_custom_call.1} parent=1 // pred_check
      _
    $region55: #{tpu_custom_call.1} parent=1 // pred_check_branch
      %221 = sbr.rel (0) target = $region57
    $region56: #{tpu_custom_call.1} parent=1 // pred_region
      _
    $region57: #{tpu_custom_call.1} parent=1 // pred_fallthru
      _
    // Predicated region
    $region58: #{tpu_custom_call.1} parent=1 // pred_check
      _
    $region59: #{tpu_custom_call.1} parent=1 // pred_check_branch
      %223 = sbr.rel (0) target = $region61
    $region60: #{tpu_custom_call.1} parent=1 // pred_region
      _
    $region61: #{tpu_custom_call.1} parent=1 // pred_fallthru
      _
    // Predicated region
    $region62: #{tpu_custom_call.1} parent=1 // pred_check
      _
    $region63: #{tpu_custom_call.1} parent=1 // pred_check_branch
      %225 = sbr.rel (0) target = $region65
    $region64: #{tpu_custom_call.1} parent=1 // pred_region
      _
    $region65: #{tpu_custom_call.1} parent=1 // pred_fallthru
      _
    %226 = vsyncpa [#allocation3], 1
    %227 = vsyncpa [#allocation5], 1
    %228 = vsyncpa [#allocation8], 1

// kernel: tpu_custom_call.1
$region0: #{tpu_custom_call.1}
  #allocation0 [shape = 'u32[]', space=smem, size = 0x4, offset = 0x4, fixed_abs, tag = 'smem constant byte address 0x4 - core index']
  #allocation1 [shape = 'u32[72,128]{1,0:T(1,128)}', space=vmem, size = 0x9000, scoped, tag = 'internal scratch']
  %s0 = inlined_call_operand.hbm [shape: f32[8,32], index: 0, kind: input, shape index: {}]
  %s1 = inlined_call_operand.hbm [shape: f32[8,16], index: 1, kind: input, shape index: {}]
  %s2 = inlined_call_operand.hbm [shape: f32[8,32], index: 2, kind: input, shape index: {}]
  %s3 = inlined_call_operand.hbm [shape: f32[8,16], index: 3, kind: input, shape index: {}]
  %s4 = inlined_call_operand.vmem [shape: f32[1,8], index: 4, kind: input, shape index: {}]
  %s5 = inlined_call_operand.vmem [shape: f32[1,8], index: 5, kind: input, shape index: {}]
  %s6 = inlined_call_operand.vmem [shape: f32[8,1], index: 6, kind: output, shape index: {0}]
  %s7 = inlined_call_operand.vmem [shape: f32[8,1], index: 7, kind: output, shape index: {1}]
  %s8 = inlined_call_operand.vmem [shape: f32[8,1], index: 8, kind: output, shape index: {2}]
  %9 = xla_tuple %s6, %s7, %s8
  %s10 = sld [smem:[#allocation0]]
  $region66: #{tpu_custom_call.1} parent=0
    _
  %s12 = ssub.s32 1, %s10
  %s13 = scalar_select 0, %s12, %s10
  $region1: #{tpu_custom_call.1} parent=0
    #allocation2 [shape = 'u8[4096]{0}', space=vmem, size = 0x1000, scoped, tag = 'input window, operand 0, single buffered']
    #allocation3 [shape = 's32[1]{0}', space=sflag, size = 0x4, scoped, tag = 'scoped memory for tpu_custom_call.1']
    #allocation4 [shape = 'u8[4096]{0}', space=vmem, size = 0x1000, scoped, tag = 'input window, operand 1, single buffered']
    #allocation5 [shape = 's32[1]{0}', space=sflag, size = 0x4, scoped, tag = 'scoped memory for tpu_custom_call.1']
    #allocation6 [shape = 'u8[4096]{0}', space=vmem, size = 0x1000, scoped, tag = 'input window, operand 2, single buffered']
    #allocation7 [shape = 'u8[4096]{0}', space=vmem, size = 0x1000, scoped, tag = 'input window, operand 3, single buffered']
    #allocation8 [shape = 's32[1]{0}', space=sflag, size = 0x4, scoped, tag = 'scoped memory for tpu_custom_call.1']
    %14 = vsyncpa [#allocation3], 0
    %15 = vsyncpa [#allocation5], 0
    %16 = vsyncpa [#allocation8], 0
    // Predicated region
    $region2: #{tpu_custom_call.1} parent=1 // pred_check
      _
    $region3: #{tpu_custom_call.1} parent=1 // pred_check_branch
      %18 = sbr.rel (0) target = $region5
    $region4: #{tpu_custom_call.1} parent=1 // pred_region
      %20 = vsyncadd [#allocation3], 0
      %s22 = sshll.u32 %s0, 4
      %s23 = int_to_ptr.hbm [resolvable:$true] %s22
      %s24 = sshll.u32 [#allocation2], 4
      %s25 = int_to_ptr.vmem [resolvable:$true] %s24
      %27 = dma.hbm_to_vmem [thread:$0]  %s23, 128, %s25, [#allocation3]
    $region5: #{tpu_custom_call.1} parent=1 // pred_fallthru
      _
    // Predicated region
    $region6: #{tpu_custom_call.1} parent=1 // pred_check
      _
    $region7: #{tpu_custom_call.1} parent=1 // pred_check_branch
      %29 = sbr.rel (0) target = $region9
    $region8: #{tpu_custom_call.1} parent=1 // pred_region
      %31 = vsyncadd [#allocation5], 0
      %s33 = sshll.u32 %s1, 4
      %s34 = int_to_ptr.hbm [resolvable:$true] %s33
      %s35 = sshll.u32 [#allocation4], 4
      %s36 = int_to_ptr.vmem [resolvable:$true] %s35
      %38 = dma.hbm_to_vmem [thread:$0]  %s34, 128, %s36, [#allocation5]
    $region9: #{tpu_custom_call.1} parent=1 // pred_fallthru
      _
    // Predicated region
    $region10: #{tpu_custom_call.1} parent=1 // pred_check
      _
    $region11: #{tpu_custom_call.1} parent=1 // pred_check_branch
      %40 = sbr.rel (0) target = $region13
    $region12: #{tpu_custom_call.1} parent=1 // pred_region
      %42 = vsyncadd [#allocation5], 0
      %s44 = sshll.u32 %s2, 4
      %s45 = int_to_ptr.hbm [resolvable:$true] %s44
      %s46 = sshll.u32 [#allocation6], 4
      %s47 = int_to_ptr.vmem [resolvable:$true] %s46
      %49 = dma.hbm_to_vmem [thread:$0]  %s45, 128, %s47, [#allocation5]
    $region13: #{tpu_custom_call.1} parent=1 // pred_fallthru
      _
    // Predicated region
    $region14: #{tpu_custom_call.1} parent=1 // pred_check
      _
    $region15: #{tpu_custom_call.1} parent=1 // pred_check_branch
      %51 = sbr.rel (0) target = $region17
    $region16: #{tpu_custom_call.1} parent=1 // pred_region
      %53 = vsyncadd [#allocation8], 0
      %s55 = sshll.u32 %s3, 4
      %s56 = int_to_ptr.hbm [resolvable:$true] %s55
      %s57 = sshll.u32 [#allocation7], 4
      %s58 = int_to_ptr.vmem [resolvable:$true] %s57
      %60 = dma.hbm_to_vmem [thread:$0]  %s56, 128, %s58, [#allocation8]
    $region17: #{tpu_custom_call.1} parent=1 // pred_fallthru
      _
    // Predicated region
    $region18: #{tpu_custom_call.1} parent=1 // pred_check
      _
    $region19: #{tpu_custom_call.1} parent=1 // pred_check_branch
      %62 = sbr.rel (0) target = $region21
    $region20: #{tpu_custom_call.1} parent=1 // pred_region
      _
    $region21: #{tpu_custom_call.1} parent=1 // pred_fallthru
      _
    // Predicated region
    $region22: #{tpu_custom_call.1} parent=1 // pred_check
      _
    $region23: #{tpu_custom_call.1} parent=1 // pred_check_branch
      %64 = sbr.rel (0) target = $region25
    $region24: #{tpu_custom_call.1} parent=1 // pred_region
      _
    $region25: #{tpu_custom_call.1} parent=1 // pred_fallthru
      _
    // Predicated region
    $region26: #{tpu_custom_call.1} parent=1 // pred_check
      _
    $region27: #{tpu_custom_call.1} parent=1 // pred_check_branch
      %66 = sbr.rel (0) target = $region29
    $region28: #{tpu_custom_call.1} parent=1 // pred_region
      %68 = dma.done [#allocation3], 128
    $region29: #{tpu_custom_call.1} parent=1 // pred_fallthru
      _
    // Predicated region
    $region30: #{tpu_custom_call.1} parent=1 // pred_check
      _
    $region31: #{tpu_custom_call.1} parent=1 // pred_check_branch
      %70 = sbr.rel (0) target = $region33
    $region32: #{tpu_custom_call.1} parent=1 // pred_region
      %72 = dma.done [#allocation5], 128
    $region33: #{tpu_custom_call.1} parent=1 // pred_fallthru
      _
    // Predicated region
    $region34: #{tpu_custom_call.1} parent=1 // pred_check
      _
    $region35: #{tpu_custom_call.1} parent=1 // pred_check_branch
      %74 = sbr.rel (0) target = $region37
    $region36: #{tpu_custom_call.1} parent=1 // pred_region
      %76 = dma.done [#allocation5], 128
    $region37: #{tpu_custom_call.1} parent=1 // pred_fallthru
      _
    // Predicated region
    $region38: #{tpu_custom_call.1} parent=1 // pred_check
      _
    $region39: #{tpu_custom_call.1} parent=1 // pred_check_branch
      %78 = sbr.rel (0) target = $region41
    $region40: #{tpu_custom_call.1} parent=1 // pred_region
      %80 = dma.done [#allocation8], 128
    $region41: #{tpu_custom_call.1} parent=1 // pred_fallthru
      _
    %s81 = smul.u32 0, 8
    %v82 = vlaneseq
    %v83 = vshrl.u32 %v82, 7
    %v84 = vstv %s81
    %v85 = vadd.s32 %v84, %v83
    %v86 = vlaneseq
    %v87 = vand.u32 %v86, 127
    %vm88 = vcmp.eq.s32.totalorder %v87, %v85
    %v89 = vld [vmem:[#allocation2] sm:$0xff]
    %v90 = vld [vmem:[#allocation6] sm:$0xff]
    %v91 = vmul.f32 %v89, %v89
    %vm92 = vcmask 261120
    %v93 = vsel %vm92, %v91, 0.0
    %94 = vadd.xlane.f32.xlu0 %v93
    %v95 = vpop.xlane.xlu0 %94
    %v96 = vadd.f32 %v89, %v89
    %v98 = vsel %vm92, %v96, 0
    %v101 = vsel %vm92, %v90, 0
    %103 = vmatpush.xpose.msra.mxu0 0.0
    %104 = vmatpush.xpose.msra.mxu0 0.0
    %105 = vmatpush.xpose.msra.mxu0 0.0
    %106 = vmatpush.xpose.msra.mxu0 0.0
    %107 = vmatpush.xpose.msra.mxu0 0.0
    %108 = vmatpush.xpose.msra.mxu0 0.0
    %109 = vmatpush.xpose.msra.mxu0 0.0
    %110 = vmatpush.xpose.msra.mxu0 0.0
    %111 = vmatpush.xpose.msra.mxu0 0.0
    %112 = vmatpush.xpose.msra.mxu0 0.0
    %113 = vmatpush.xpose.msra.mxu0 0.0
    %114 = vmatpush.xpose.msra.mxu0 0.0
    %115 = vmatpush.xpose.msra.mxu0 0.0
    %116 = vmatpush.xpose.msra.mxu0 0.0
    %117 = vmatpush.xpose.msra.mxu0 0.0
    %118 = vmatpush.xpose.msra.mxu0 %v101
    %119 = vmatmul.f32.gmra.mxu0 %v98
    %v120 = vpop.f32.mrf.mxu0
    %v121 = vadd.f32 0.0, %v120
    %122 = vdwg.mxu0
    %v123 = vld [vmem:[%s4] sm:$0x1]
    %v125 = vperm.slane %v123, 0
    %v127 = vadd.f32 %v95, %v125
    %v128 = vsub.f32 %v127, %v121
    %v129 = vmax.f32 %v128, 0.0
    %v130 = vsel %vm88, 0.0, %v129
    %v131 = vadd.f32 %v130, 1e-12
    %v132 = vrsqrt.pop %v131
    %v133 = vmul.f32 %v132, %v131
    %v134 = vmul.f32 %v133, %v132
    %v135 = vmul.f32 0.5, %v134
    %v136 = vsub.f32 1.5, %v135
    %v137 = vmul.f32 %v132, %v136
    %v138 = vmul.f32 %v131, %v137
    %vm139 = vcmp.eq.f32.partialorder %v131, inf
    %v140 = vsel %vm139, %v131, %v138
    %vm141 = vcmp.eq.f32.partialorder %v131, 0.0
    %v142 = vand.u32 %v131, 2147483648
    %v143 = vsel %vm141, %v142, %v140
    %v144 = vld [vmem:[#allocation4] sm:$0xff]
    %v145 = vld [vmem:[#allocation7] sm:$0xff]
    %v146 = vmul.f32 %v144, %v144
    %vm147 = vcmask 130048
    %v148 = vsel %vm147, %v146, 0.0
    %149 = vadd.xlane.f32.xlu0 %v148
    %v150 = vpop.xlane.xlu0 %149
    %v151 = vadd.f32 %v144, %v144
    %v153 = vsel %vm147, %v151, 0
    %v156 = vsel %vm147, %v145, 0
    %158 = vmatpush.xpose.msra.mxu0 0.0
    %159 = vmatpush.xpose.msra.mxu0 0.0
    %160 = vmatpush.xpose.msra.mxu0 0.0
    %161 = vmatpush.xpose.msra.mxu0 0.0
    %162 = vmatpush.xpose.msra.mxu0 0.0
    %163 = vmatpush.xpose.msra.mxu0 0.0
    %164 = vmatpush.xpose.msra.mxu0 0.0
    %165 = vmatpush.xpose.msra.mxu0 0.0
    %166 = vmatpush.xpose.msra.mxu0 0.0
    %167 = vmatpush.xpose.msra.mxu0 0.0
    %168 = vmatpush.xpose.msra.mxu0 0.0
    %169 = vmatpush.xpose.msra.mxu0 0.0
    %170 = vmatpush.xpose.msra.mxu0 0.0
    %171 = vmatpush.xpose.msra.mxu0 0.0
    %172 = vmatpush.xpose.msra.mxu0 0.0
    %173 = vmatpush.xpose.msra.mxu0 %v156
    %174 = vmatmul.f32.gmra.mxu0 %v153
    %v175 = vpop.f32.mrf.mxu0
    %v176 = vadd.f32 0.0, %v175
    %177 = vdwg.mxu0
    %v178 = vld [vmem:[%s5] sm:$0x1]
    %v180 = vperm.slane %v178, 0
    %v182 = vadd.f32 %v150, %v180
    %v183 = vsub.f32 %v182, %v176
    %v184 = vmax.f32 %v183, 0.0
    %v185 = vsel %vm88, 0.0, %v184
    %v186 = vadd.f32 %v185, 1e-12
    %v187 = vrsqrt.pop %v186
    %v188 = vmul.f32 %v187, %v186
    %v189 = vmul.f32 %v188, %v187
    %v190 = vmul.f32 0.5, %v189
    %v191 = vsub.f32 1.5, %v190
    %v192 = vmul.f32 %v187, %v191
    %v193 = vmul.f32 %v186, %v192
    %vm194 = vcmp.eq.f32.partialorder %v186, inf
    %v195 = vsel %vm194, %v186, %v193
    %vm196 = vcmp.eq.f32.partialorder %v186, 0.0
    %v197 = vand.u32 %v186, 2147483648
    %v198 = vsel %vm196, %v197, %v195
    %vm199 = vcmask 64512
    %v200 = vsel %vm199, %v143, 0.0
    %201 = vadd.xlane.f32.xlu0 %v200
    %v202 = vpop.xlane.xlu0 %201
    %vm203 = vcmask 7168
    %204 = vst.msk [vmem:[%s6] sm:$0xff] %vm203, %v202
    %v205 = vsel %vm199, %v198, 0.0
    %206 = vadd.xlane.f32.xlu0 %v205
    %v207 = vpop.xlane.xlu0 %206
    %208 = vst.msk [vmem:[%s7] sm:$0xff] %vm203, %v207
    %v209 = vmul.f32 %v143, %v198
    %v210 = vsel %vm199, %v209, 0.0
    %211 = vadd.xlane.f32.xlu0 %v210
    %v212 = vpop.xlane.xlu0 %211
    %213 = vst.msk [vmem:[%s8] sm:$0xff] %vm203, %v212
    // Predicated region
    $region42: #{tpu_custom_call.1} parent=1 // pred_check
      _
    $region43: #{tpu_custom_call.1} parent=1 // pred_check_branch
      %215 = sbr.rel (0) target = $region45
    $region44: #{tpu_custom_call.1} parent=1 // pred_region
      _
    $region45: #{tpu_custom_call.1} parent=1 // pred_fallthru
      _
    // Predicated region
    $region46: #{tpu_custom_call.1} parent=1 // pred_check
      _
    $region47: #{tpu_custom_call.1} parent=1 // pred_check_branch
      %217 = sbr.rel (0) target = $region49
    $region48: #{tpu_custom_call.1} parent=1 // pred_region
      _
    $region49: #{tpu_custom_call.1} parent=1 // pred_fallthru
      _
    // Predicated region
    $region50: #{tpu_custom_call.1} parent=1 // pred_check
      _
    $region51: #{tpu_custom_call.1} parent=1 // pred_check_branch
      %219 = sbr.rel (0) target = $region53
    $region52: #{tpu_custom_call.1} parent=1 // pred_region
      _
    $region53: #{tpu_custom_call.1} parent=1 // pred_fallthru
      _
    // Predicated region
    $region54: #{tpu_custom_call.1} parent=1 // pred_check
      _
    $region55: #{tpu_custom_call.1} parent=1 // pred_check_branch
      %221 = sbr.rel (0) target = $region57
    $region56: #{tpu_custom_call.1} parent=1 // pred_region
      _
    $region57: #{tpu_custom_call.1} parent=1 // pred_fallthru
      _
    // Predicated region
    $region58: #{tpu_custom_call.1} parent=1 // pred_check
      _
    $region59: #{tpu_custom_call.1} parent=1 // pred_check_branch
      %223 = sbr.rel (0) target = $region61
    $region60: #{tpu_custom_call.1} parent=1 // pred_region
      _
    $region61: #{tpu_custom_call.1} parent=1 // pred_fallthru
      _
    // Predicated region
    $region62: #{tpu_custom_call.1} parent=1 // pred_check
      _
    $region63: #{tpu_custom_call.1} parent=1 // pred_check_branch
      %225 = sbr.rel (0) target = $region65
    $region64: #{tpu_custom_call.1} parent=1 // pred_region
      _
    $region65: #{tpu_custom_call.1} parent=1 // pred_fallthru
      _
    %226 = vsyncpa [#allocation3], 1
    %227 = vsyncpa [#allocation5], 1
    %228 = vsyncpa [#allocation8], 1

</llo_original>
